<compile_context>
chip_gen: v5e
topology: v5e:2x2
jax: 0.10.0
libtpu: 0.0.40
codegen_flags: <defaults>
</compile_context>

<pallas_src>
import functools

import jax
import jax.numpy as jnp
from jax.experimental import pallas as pl
from jax.experimental.pallas import tpu as pltpu


def _round_up(x, m):
    return ((x + m - 1) // m) * m


def _cdiv(a, b):
    return -(-a // b)


def _vmem_capacity_bytes():
    """Physical VMEM of the current generation (fallback: v7x's 64 MiB)."""
    try:
        return int(pltpu.get_tpu_info().vmem_capacity_bytes)
    except Exception:
        return 64 * 1024 * 1024


def _pick_tb(batch, max_tb=128):
    """Batch tile: multiple of 8 minimizing padded rows; prefer >=2 tiles
    (megacore work on v7x), then the largest such tile."""
    best_key, best_tb = None, 8
    for tb in range(8, max_tb + 1, 8):
        n_tiles = _cdiv(batch, tb)
        waste = n_tiles * tb - batch
        key = (waste, 0 if n_tiles >= 2 else 1, -tb)
        if best_key is None or key < best_key:
            best_key, best_tb = key, tb
    return best_tb


def prepare_classifier_params(weight, bias):
    """Hoisted (call-once) parameter prep: transpose + lane-pad the classifier.

    weight: [num_classes, out_dim], bias: [num_classes].
    Returns (w_t [out_dim, C_pad], b2 [1, C_pad] f32, num_classes).
    """
    num_classes, out_dim = weight.shape
    c_pad = _round_up(num_classes, 128)
    w_t = jnp.pad(weight.T, ((0, 0), (0, c_pad - num_classes)))
    b2 = jnp.pad(bias.astype(jnp.float32), (0, c_pad - num_classes))
    return w_t, b2.reshape(1, c_pad), num_classes


def _cls_head_avgpool_kernel(cls_ref, patch_ref, w_ref, b_ref, o_ref, acc_ref,
                             *, inv_s, n_cls_feat, mask_s, ts):
    # Grid: (B tiles [parallel], S tiles [arbitrary, last]).
    # cls_ref:   [tb, nD]      class tokens        (resident over S)
    # patch_ref: [tb, ts, D]   patch-token tile    (streamed)
    # w_ref:     [out_dim, Cp] full lane-padded W^T (resident)
    # b_ref:     [1, Cp]       f32 bias            (resident)
    # o_ref:     [tb, Cp]      f32 logits          (resident over S)
    # acc_ref:   [tb, D]       f32 running patch-token sum
    s = pl.program_id(1)

    @pl.when(s == 0)
    def _():
        acc_ref[...] = jnp.zeros_like(acc_ref)
        # Class-token contribution + bias up front: this MXU dot overlaps the
        # first patch-token DMA.  Static ref slice -> no concat temp.  Dot runs
        # in the operands' native dtype (bf16 weights -> bf16 MXU), f32 accum.
        o_ref[...] = (
            jnp.dot(cls_ref[...], w_ref[:n_cls_feat, :],
                    preferred_element_type=jnp.float32)
            + b_ref[...])

    # Accumulate the patch-token sum in float32 (keeps the reduction on the
    # f32 VPU path — important on v5e, which has no bf16 VALU).
    x = patch_ref[...].astype(jnp.float32)
    if mask_s is not None:  # static: ragged last S tile -> zero the OOB rows
        row = s * ts + jax.lax.broadcasted_iota(jnp.int32, (ts, 1), 0)
        x = jnp.where((row < mask_s)[None, :, :], x, 0.0)
    acc_ref[...] += jnp.sum(x, axis=1)

    @pl.when(s == pl.num_programs(1) - 1)
    def _():
        mean_patch = acc_ref[...] * inv_s
        # Keep the mean-patch dot in f32 (classifier-head numerics).
        o_ref[...] += jnp.dot(mean_patch,
                              w_ref[n_cls_feat:, :].astype(jnp.float32),
                              preferred_element_type=jnp.float32)


def _cls_head_kernel(cls_ref, w_ref, b_ref, o_ref):
    # Grid: (B tiles, C tiles), both parallel. One MXU dot per step.
    o_ref[...] = (jnp.dot(cls_ref[...], w_ref[...],
                          preferred_element_type=jnp.float32)
                  + b_ref[...])


def linear_classifier_forward(x_tokens_list, w_t, b2, num_classes,
                              use_n_blocks, use_avgpool,
                              _force_patch_block_bytes=None):
    """Equivalent of LinearClassifier.forward(x_tokens_list).

    w_t / b2 / num_classes come from prepare_classifier_params (hoisted)."""
    blocks = x_tokens_list[-use_n_blocks:]
    cls_feat = jnp.concatenate([c for _, c in blocks], axis=-1)   # [B, nD]
    B, nD = cls_feat.shape
    out_dim, c_pad = w_t.shape

    vmem_budget = _vmem_capacity_bytes() * 3 // 4    # ~96 MiB v5e/v6e, ~48 MiB v7x
    w_bytes = w_t.size * w_t.dtype.itemsize

    if use_avgpool:
        patch_last = blocks[-1][0]                   # [B, S, D], native dtype, NO pad
        S, D = patch_last.shape[1], patch_last.shape[2]
        assert out_dim == nD + D

        tb = _pick_tb(B, 128)
        b_grid = _cdiv(B, tb)
        itemsize = patch_last.dtype.itemsize

        # VMEM resident / double-buffered besides the patch stream.
        resident = (2 * w_bytes + 2 * b2.size * 4
                    + 2 * tb * nD * cls_feat.dtype.itemsize
                    + 2 * tb * c_pad * 4
                    + tb * D * 4)
        patch_budget = min(24 << 20,
                           max(256 * 1024,
                               (vmem_budget - resident) // 2 - (1 << 20)))
        if _force_patch_block_bytes is not None:     # test hook (ragged-S path)
            patch_budget = _force_patch_block_bytes
        ts_cap = max(8, (patch_budget // max(1, tb * D * itemsize)) // 8 * 8)
        if ts_cap >= S:
            ts, s_grid, mask_s = S, 1, None          # single full-S tile
        else:
            ts = int(ts_cap)
            s_grid = _cdiv(S, ts)
            mask_s = S if S % ts else None           # mask only if ragged

        vmem_limit = int(min(vmem_budget,
                             max(32 << 20,
                                 resident + 2 * tb * ts * D * itemsize
                                 + (4 << 20))))

        cost = pl.CostEstimate(
            flops=int(2 * B * out_dim * c_pad + B * S * D),
            transcendentals=0,
            bytes_accessed=int(patch_last.size * itemsize
                               + cls_feat.size * cls_feat.dtype.itemsize
                               + w_bytes + B * c_pad * 4))

        kernel = functools.partial(_cls_head_avgpool_kernel,
                                   inv_s=1.0 / S, n_cls_feat=nD,
                                   mask_s=mask_s, ts=ts)
        out = pl.pallas_call(
            kernel,
            out_shape=jax.ShapeDtypeStruct((B, c_pad), jnp.float32),
            grid=(b_grid, s_grid),
            in_specs=[
                pl.BlockSpec((tb, nD), lambda b, s: (b, 0)),          # cls (resident)
                pl.BlockSpec((tb, ts, D), lambda b, s: (b, s, 0)),    # patch stream
                pl.BlockSpec((out_dim, c_pad), lambda b, s: (0, 0)),  # W^T (resident)
                pl.BlockSpec((1, c_pad), lambda b, s: (0, 0)),        # bias (resident)
            ],
            out_specs=pl.BlockSpec((tb, c_pad), lambda b, s: (b, 0)),
            scratch_shapes=[pltpu.VMEM((tb, D), jnp.float32)],
            compiler_params=pltpu.CompilerParams(
                dimension_semantics=("parallel", "arbitrary"),
                vmem_limit_bytes=vmem_limit),
            cost_estimate=cost,
        )(cls_feat, patch_last, w_t, b2)
    else:
        assert out_dim == nD
        tb = _pick_tb(B, 256)
        b_grid = _cdiv(B, tb)
        # Class-dim tile: largest power-of-two multiple of 128 dividing C_pad.
        tc = next(t for t in (2048, 1024, 512, 256, 128) if c_pad % t == 0)
        c_grid = c_pad // tc

        per_step = (tb * nD * cls_feat.dtype.itemsize
                    + out_dim * tc * w_t.dtype.itemsize
                    + tc * 4 + tb * tc * 4)
        vmem_limit = int(min(vmem_budget,
                             max(32 << 20, 2 * per_step + (4 << 20))))

        cost = pl.CostEstimate(
            flops=int(2 * B * out_dim * c_pad),
            transcendentals=0,
            bytes_accessed=int(cls_feat.size * cls_feat.dtype.itemsize
                               + w_bytes + B * c_pad * 4))
        out = pl.pallas_call(
            _cls_head_kernel,
            out_shape=jax.ShapeDtypeStruct((B, c_pad), jnp.float32),
            grid=(b_grid, c_grid),
            in_specs=[
                pl.BlockSpec((tb, nD), lambda b, c: (b, 0)),
                pl.BlockSpec((out_dim, tc), lambda b, c: (0, c)),
                pl.BlockSpec((1, tc), lambda b, c: (0, c)),
            ],
            out_specs=pl.BlockSpec((tb, tc), lambda b, c: (b, c)),
            compiler_params=pltpu.CompilerParams(
                dimension_semantics=("parallel", "parallel"),
                vmem_limit_bytes=vmem_limit),
            cost_estimate=cost,
        )(cls_feat, w_t, b2)

    return out[:, :num_classes]


if __name__ == "__main__":
    key = jax.random.PRNGKey(0)
    B, S, D = 2, 12, 32          # S deliberately not a multiple of 8
    use_n_blocks = 2
    num_classes = 100            # not a multiple of 128 -> exercises lane pad + slice

    keys = jax.random.split(key, 2 * use_n_blocks + 2)
    x_tokens_list = []
    for i in range(use_n_blocks):
        patch = jax.random.normal(keys[2 * i], (B, S, D), dtype=jnp.float32)
        cls = jax.random.normal(keys[2 * i + 1], (B, D), dtype=jnp.float32)
        x_tokens_list.append((patch, cls))

    def reference(weight, bias, use_avgpool):
        blk = x_tokens_list[-use_n_blocks:]
        feat = jnp.concatenate([c for _, c in blk], axis=-1)
        if use_avgpool:
            feat = jnp.concatenate(
                [feat, jnp.mean(blk[-1][0], axis=1)], axis=-1)
        return feat.astype(jnp.float32) @ weight.T + bias

    for use_avgpool in (True, False):
        out_dim = use_n_blocks * D + (D if use_avgpool else 0)
        # Parameter init matching the module: weight ~ N(0, 0.01), bias = 0.
        w = 0.01 * jax.random.normal(keys[2 * use_n_blocks + int(use_avgpool)],
                                     (num_classes, out_dim), dtype=jnp.float32)
        b = jnp.zeros((num_classes,), dtype=jnp.float32)
        w_t, b2, nc = prepare_classifier_params(w, b)   # hoisted, once per head

        out = jax.block_until_ready(
            linear_classifier_forward(x_tokens_list, w_t, b2, nc,
                                      use_n_blocks, use_avgpool))
        ref = reference(w, b, use_avgpool)
        assert out.shape == (B, num_classes) and out.dtype == jnp.float32
        assert jnp.allclose(out, ref, atol=1e-4, rtol=1e-4)

        if use_avgpool:
            # Force a tiny S tile so the ragged-last-tile masking path runs too.
            out2 = jax.block_until_ready(
                linear_classifier_forward(x_tokens_list, w_t, b2, nc,
                                          use_n_blocks, True,
                                          _force_patch_block_bytes=8 * 1024))
            assert jnp.allclose(out2, ref, atol=1e-4, rtol=1e-4)

    print("KERNEL_OK")
</pallas_src>

<mosaic_0001>
module attributes {stable_mosaic.version = 11 : i64} {
  func.func @_cls_head_avgpool_kernel(%arg0: i32, %arg1: i32, %arg2: memref<8x64xf32, #tpu.memory_space<vmem>>, %arg3: memref<8x12x32xf32, #tpu.memory_space<vmem>>, %arg4: memref<96x128xf32, #tpu.memory_space<vmem>>, %arg5: memref<1x128xf32, #tpu.memory_space<vmem>>, %arg6: memref<8x128xf32, #tpu.memory_space<vmem>>, %arg7: memref<8x32xf32, #tpu.memory_space<vmem>>) attributes {dimension_semantics = [#tpu.dimension_semantics<parallel>, #tpu.dimension_semantics<arbitrary>], iteration_bounds = array<i64: 1, 1>, scalar_prefetch = 0 : i64, scratch_operands = 1 : i64, tpu.core_type = #tpu.core_type<tc>, window_params = [{transform_indices = @transform_0, window_bounds = array<i64: 8, 64>}, {transform_indices = @transform_1, window_bounds = array<i64: 8, 12, 32>}, {pipeline_mode = #tpu.pipeline_mode<synchronous>, transform_indices = @transform_2, window_bounds = array<i64: 96, 128>}, {pipeline_mode = #tpu.pipeline_mode<synchronous>, transform_indices = @transform_3, window_bounds = array<i64: 1, 128>}, {transform_indices = @transform_4, window_bounds = array<i64: 8, 128>}]} {
    %c0_i32 = arith.constant 0 : i32
    %0 = arith.cmpi eq, %arg1, %c0_i32 : i32
    %1 = arith.extui %0 : i1 to i32
    %c0_i32_0 = arith.constant 0 : i32
    %2 = arith.cmpi ne, %1, %c0_i32_0 : i32
    scf.if %2 {
      %cst_9 = arith.constant 0.000000e+00 : f32
      %11 = vector.broadcast %cst_9 : f32 to vector<8x32xf32>
      %c0_10 = arith.constant 0 : index
      %c0_11 = arith.constant 0 : index
      %12 = vector.load %arg7[%c0_10, %c0_11] : memref<8x32xf32, #tpu.memory_space<vmem>>, vector<8x32xf32>
      tpu.vector_store %arg7[%c0_10, %c0_11], %11 {strides = array<i32>} : memref<8x32xf32, #tpu.memory_space<vmem>>, vector<8x32xf32>,
      %c0_12 = arith.constant 0 : index
      %c0_13 = arith.constant 0 : index
      %13 = vector.load %arg2[%c0_12, %c0_13] : memref<8x64xf32, #tpu.memory_space<vmem>>, vector<8x64xf32>
      %c0_14 = arith.constant 0 : index
      %c0_15 = arith.constant 0 : index
      %14 = vector.load %arg4[%c0_14, %c0_15] : memref<96x128xf32, #tpu.memory_space<vmem>>, vector<64x128xf32>
      %cst_16 = arith.constant dense<0.000000e+00> : vector<8x128xf32>
      %15 = tpu.matmul %13, %14, %cst_16 {dimension_numbers = #tpu.dot_dimension_numbers<[1], [0], [0], [1], [0, 0, 1, 1], [], []>} : vector<8x64xf32>, vector<64x128xf32>, vector<8x128xf32> -> vector<8x128xf32>
      %c0_17 = arith.constant 0 : index
      %c0_18 = arith.constant 0 : index
      %16 = vector.load %arg5[%c0_17, %c0_18] : memref<1x128xf32, #tpu.memory_space<vmem>>, vector<1x128xf32>
      %17 = vector.broadcast %16 : vector<1x128xf32> to vector<8x128xf32>
      %18 = arith.addf %15, %17 : vector<8x128xf32>
      %c0_19 = arith.constant 0 : index
      %c0_20 = arith.constant 0 : index
      %19 = vector.load %arg6[%c0_19, %c0_20] : memref<8x128xf32, #tpu.memory_space<vmem>>, vector<8x128xf32>
      tpu.vector_store %arg6[%c0_19, %c0_20], %18 {strides = array<i32>} : memref<8x128xf32, #tpu.memory_space<vmem>>, vector<8x128xf32>,
    } else {
    }
    %c0 = arith.constant 0 : index
    %c0_1 = arith.constant 0 : index
    %c0_2 = arith.constant 0 : index
    %3 = vector.load %arg3[%c0, %c0_1, %c0_2] : memref<8x12x32xf32, #tpu.memory_space<vmem>>, vector<8x12x32xf32>
    %c0_3 = arith.constant 0 : index
    %c0_4 = arith.constant 0 : index
    %4 = vector.load %arg7[%c0_3, %c0_4] : memref<8x32xf32, #tpu.memory_space<vmem>>, vector<8x32xf32>
    %cst = arith.constant dense<0.000000e+00> : vector<8x32xf32>
    %5 = vector.multi_reduction <add>, %3, %cst [1] : vector<8x12x32xf32> to vector<8x32xf32>
    %6 = arith.addf %4, %5 : vector<8x32xf32>
    %c0_5 = arith.constant 0 : index
    %c0_6 = arith.constant 0 : index
    %7 = vector.load %arg7[%c0_5, %c0_6] : memref<8x32xf32, #tpu.memory_space<vmem>>, vector<8x32xf32>
    tpu.vector_store %arg7[%c0_5, %c0_6], %6 {strides = array<i32>} : memref<8x32xf32, #tpu.memory_space<vmem>>, vector<8x32xf32>,
    %c0_i32_7 = arith.constant 0 : i32
    %8 = arith.cmpi eq, %arg1, %c0_i32_7 : i32
    %9 = arith.extui %8 : i1 to i32
    %c0_i32_8 = arith.constant 0 : i32
    %10 = arith.cmpi ne, %9, %c0_i32_8 : i32
    scf.if %10 {
      %c0_9 = arith.constant 0 : index
      %c0_10 = arith.constant 0 : index
      %11 = vector.load %arg7[%c0_9, %c0_10] : memref<8x32xf32, #tpu.memory_space<vmem>>, vector<8x32xf32>
      %cst_11 = arith.constant 0.0833333358 : f32
      %12 = vector.broadcast %cst_11 : f32 to vector<8x32xf32>
      %13 = arith.mulf %11, %12 : vector<8x32xf32>
      %c0_12 = arith.constant 0 : index
      %c0_13 = arith.constant 0 : index
      %14 = vector.load %arg6[%c0_12, %c0_13] : memref<8x128xf32, #tpu.memory_space<vmem>>, vector<8x128xf32>
      %c64 = arith.constant 64 : index
      %c0_14 = arith.constant 0 : index
      %15 = vector.load %arg4[%c64, %c0_14] : memref<96x128xf32, #tpu.memory_space<vmem>>, vector<32x128xf32>
      %cst_15 = arith.constant dense<0.000000e+00> : vector<8x128xf32>
      %16 = tpu.matmul %13, %15, %cst_15 {dimension_numbers = #tpu.dot_dimension_numbers<[1], [0], [0], [1], [0, 0, 1, 1], [], []>} : vector<8x32xf32>, vector<32x128xf32>, vector<8x128xf32> -> vector<8x128xf32>
      %17 = arith.addf %14, %16 : vector<8x128xf32>
      %c0_16 = arith.constant 0 : index
      %c0_17 = arith.constant 0 : index
      %18 = vector.load %arg6[%c0_16, %c0_17] : memref<8x128xf32, #tpu.memory_space<vmem>>, vector<8x128xf32>
      tpu.vector_store %arg6[%c0_16, %c0_17], %17 {strides = array<i32>} : memref<8x128xf32, #tpu.memory_space<vmem>>, vector<8x128xf32>,
    } else {
    }
    return
  }
  func.func @transform_0(%arg0: i32, %arg1: i32) -> (i32, i32) {
    %c0_i32 = arith.constant 0 : i32
    %c0_i32_0 = arith.constant 0 : i32
    return %arg0, %c0_i32 : i32, i32
  }
  func.func @transform_1(%arg0: i32, %arg1: i32) -> (i32, i32, i32) {
    %c0_i32 = arith.constant 0 : i32
    %c0_i32_0 = arith.constant 0 : i32
    return %arg0, %arg1, %c0_i32 : i32, i32, i32
  }
  func.func @transform_2(%arg0: i32, %arg1: i32) -> (i32, i32) {
    %c0_i32 = arith.constant 0 : i32
    %c0_i32_0 = arith.constant 0 : i32
    %c0_i32_1 = arith.constant 0 : i32
    return %c0_i32, %c0_i32_0 : i32, i32
  }
  func.func @transform_3(%arg0: i32, %arg1: i32) -> (i32, i32) {
    %c0_i32 = arith.constant 0 : i32
    %c0_i32_0 = arith.constant 0 : i32
    %c0_i32_1 = arith.constant 0 : i32
    return %c0_i32, %c0_i32_0 : i32, i32
  }
  func.func @transform_4(%arg0: i32, %arg1: i32) -> (i32, i32) {
    %c0_i32 = arith.constant 0 : i32
    %c0_i32_0 = arith.constant 0 : i32
    return %arg0, %c0_i32 : i32, i32
  }
}

</mosaic_0001>

<llo_original>
// kernel: tpu_custom_call.1
$region0: #{tpu_custom_call.1}
  #allocation0 [shape = 'u32[]', space=smem, size = 0x4, offset = 0x4, fixed_abs, tag = 'smem constant byte address 0x4 - core index']
  #allocation1 [shape = 'u32[72,128]{1,0:T(1,128)}', space=vmem, size = 0x9000, scoped, tag = 'internal scratch']
  #allocation2 [shape = 'f32[8,32]{1,0:T(8,128)}', space=vmem, size = 0x1000, scoped, tag = 'scratch operand']
  %s0 = inlined_call_operand.vmem [shape: f32[2,64], index: 0, kind: input, shape index: {}]
  %s1 = inlined_call_operand.vmem [shape: f32[2,12,32], index: 1, kind: input, shape index: {}]
  %s2 = inlined_call_operand.hbm [shape: f32[96,128], index: 2, kind: input, shape index: {}]
  %s3 = inlined_call_operand.vmem [shape: f32[1,128], index: 3, kind: input, shape index: {}]
  %s4 = inlined_call_operand.hbm [shape: f32[2,128], index: 4, kind: output, shape index: {}]
  %s5 = sld [smem:[#allocation0]]
  $region38: #{tpu_custom_call.1} parent=0
    _
  %s7 = ssub.s32 1, %s5
  %s8 = scalar_select 0, %s7, %s5
  $region1: #{tpu_custom_call.1} parent=0
    #allocation3 [shape = 'u8[49152]{0}', space=vmem, size = 0xc000, scoped, tag = 'input window, operand 2, single buffered']
    #allocation4 [shape = 's32[1]{0}', space=sflag, size = 0x4, scoped, tag = 'scoped memory for tpu_custom_call.1']
    #allocation5 [shape = 's32[1]{0}', space=sflag, size = 0x4, scoped, tag = 'scoped memory for tpu_custom_call.1']
    #allocation6 [shape = 'u8[4096]{0}', space=vmem, size = 0x1000, scoped, tag = 'output window, operand 0, single buffered']
    %9 = vsyncpa [#allocation4], 0
    %10 = vsyncpa [#allocation5], 0
    // Predicated region
    $region2: #{tpu_custom_call.1} parent=1 // pred_check
      _
    $region3: #{tpu_custom_call.1} parent=1 // pred_check_branch
      %12 = sbr.rel (0) target = $region5
    $region4: #{tpu_custom_call.1} parent=1 // pred_region
      _
    $region5: #{tpu_custom_call.1} parent=1 // pred_fallthru
      _
    // Predicated region
    $region6: #{tpu_custom_call.1} parent=1 // pred_check
      _
    $region7: #{tpu_custom_call.1} parent=1 // pred_check_branch
      %14 = sbr.rel (0) target = $region9
    $region8: #{tpu_custom_call.1} parent=1 // pred_region
      _
    $region9: #{tpu_custom_call.1} parent=1 // pred_fallthru
      _
    // Predicated region
    $region10: #{tpu_custom_call.1} parent=1 // pred_check
      _
    $region11: #{tpu_custom_call.1} parent=1 // pred_check_branch
      %16 = sbr.rel (0) target = $region13
    $region12: #{tpu_custom_call.1} parent=1 // pred_region
      %18 = vsyncadd [#allocation4], 0
      %s19 = sshll.u32 %s2, 4
      %s20 = int_to_ptr.hbm [resolvable:$true] %s19
      %s21 = sshll.u32 [#allocation3], 4
      %s22 = int_to_ptr.vmem [resolvable:$true] %s21
      %27 = dma.hbm_to_vmem [thread:$0]  %s20, 1536, %s22, [#allocation4], 128, 128, 8
    $region13: #{tpu_custom_call.1} parent=1 // pred_fallthru
      _
    // Predicated region
    $region14: #{tpu_custom_call.1} parent=1 // pred_check
      _
    $region15: #{tpu_custom_call.1} parent=1 // pred_check_branch
      %29 = sbr.rel (0) target = $region17
    $region16: #{tpu_custom_call.1} parent=1 // pred_region
      _
    $region17: #{tpu_custom_call.1} parent=1 // pred_fallthru
      _
    // Predicated region
    $region18: #{tpu_custom_call.1} parent=1 // pred_check
      _
    $region19: #{tpu_custom_call.1} parent=1 // pred_check_branch
      %31 = sbr.rel (0) target = $region21
    $region20: #{tpu_custom_call.1} parent=1 // pred_region
      %33 = dma.done [#allocation4], 1536
    $region21: #{tpu_custom_call.1} parent=1 // pred_fallthru
      _
    %p34 = scmp.eq.s32.totalorder 0, 0
    // Predicated region
    $region22: #{tpu_custom_call.1} parent=1 // pred_check
      %p35 = pneg %p34
    $region23: #{tpu_custom_call.1} parent=1 // pred_check_branch
      %37 = sbr.rel (%p35) target = $region25
    $region24: #{tpu_custom_call.1} parent=1 // pred_region
      %vm38 = vcmask 261120
      %39 = vst.msk [vmem:[#allocation2] sm:$0xff] %vm38, 0.0
      %v40 = vld [vmem:[%s0] sm:$0xff]
      %v41 = vld [vmem:[#allocation3] sm:$0xff]
      %v42 = vld [vmem:[#allocation3 + $0x8] sm:$0xff]
      %v43 = vld [vmem:[#allocation3 + $0x10] sm:$0xff]
      %v44 = vld [vmem:[#allocation3 + $0x18] sm:$0xff]
      %v45 = vld [vmem:[#allocation3 + $0x20] sm:$0xff]
      %v46 = vld [vmem:[#allocation3 + $0x28] sm:$0xff]
      %v47 = vld [vmem:[#allocation3 + $0x30] sm:$0xff]
      %v48 = vld [vmem:[#allocation3 + $0x38] sm:$0xff]
      %v49 = vld [vmem:[%s3] sm:$0x1]
      %v51 = vperm.slane %v49, 0
      %vm53 = vcmask 523264
      %v55 = vsel %vm53, %v40, 0
      %57 = vmatpush.msra.mxu0 0.0
      %58 = vmatpush.msra.mxu0 0.0
      %59 = vmatpush.msra.mxu0 0.0
      %60 = vmatpush.msra.mxu0 0.0
      %61 = vmatpush.msra.mxu0 0.0
      %62 = vmatpush.msra.mxu0 0.0
      %63 = vmatpush.msra.mxu0 0.0
      %64 = vmatpush.msra.mxu0 0.0
      %65 = vmatpush.msra.mxu0 %v48
      %66 = vmatpush.msra.mxu0 %v47
      %67 = vmatpush.msra.mxu0 %v46
      %68 = vmatpush.msra.mxu0 %v45
      %69 = vmatpush.msra.mxu0 %v44
      %70 = vmatpush.msra.mxu0 %v43
      %71 = vmatpush.msra.mxu0 %v42
      %72 = vmatpush.msra.mxu0 %v41
      %73 = vmatmul.f32.gmra.mxu0 %v55
      %v74 = vpop.f32.mrf.mxu0
      %v75 = vadd.f32 %v51, %v74
      %76 = vdwg.mxu0
      %77 = vst [vmem:[#allocation6] sm:$0xff] %v75
    $region25: #{tpu_custom_call.1} parent=1 // pred_fallthru
      _
    %v78 = vld [vmem:[%s1] sm:$0xff]
    %v79 = vld [vmem:[%s1 + $0x8] sm:$0xf]
    %v80 = vld [vmem:[%s1 + $0x10] sm:$0xff]
    %v81 = vld [vmem:[%s1 + $0x18] sm:$0xf]
    %v82 = vld [vmem:[%s1 + $0x20] sm:$0xff]
    %v83 = vld [vmem:[%s1 + $0x28] sm:$0xf]
    %v84 = vld [vmem:[%s1 + $0x30] sm:$0xff]
    %v85 = vld [vmem:[%s1 + $0x38] sm:$0xf]
    %v86 = vld [vmem:[%s1 + $0x40] sm:$0xff]
    %v87 = vld [vmem:[%s1 + $0x48] sm:$0xf]
    %v88 = vld [vmem:[%s1 + $0x50] sm:$0xff]
    %v89 = vld [vmem:[%s1 + $0x58] sm:$0xf]
    %v90 = vld [vmem:[%s1 + $0x60] sm:$0xff]
    %v91 = vld [vmem:[%s1 + $0x68] sm:$0xf]
    %v92 = vld [vmem:[%s1 + $0x70] sm:$0xff]
    %v93 = vld [vmem:[%s1 + $0x78] sm:$0xf]
    %v94 = vld [vmem:[#allocation2] sm:$0xff]
    %vm95 = vcmask 261120
    %v96 = vsel %vm95, %v78, 0.0
    %vm97 = vcmask 257024
    %v98 = vsel %vm97, %v79, 0.0
    %v99 = vadd.f32 %v96, %v98
    %v100 = vrot.slane %v99, 4
    %v101 = vadd.f32 %v99, %v100
    %v102 = vrot.slane %v101, 2
    %v103 = vadd.f32 %v101, %v102
    %v104 = vrot.slane %v103, 1
    %v105 = vadd.f32 %v103, %v104
    %v106 = vsel %vm95, %v80, 0.0
    %v107 = vsel %vm97, %v81, 0.0
    %v108 = vadd.f32 %v106, %v107
    %v109 = vrot.slane %v108, 4
    %v110 = vadd.f32 %v108, %v109
    %v111 = vrot.slane %v110, 2
    %v112 = vadd.f32 %v110, %v111
    %v113 = vrot.slane %v112, 1
    %v114 = vadd.f32 %v112, %v113
    %v115 = vsel %vm95, %v82, 0.0
    %v116 = vsel %vm97, %v83, 0.0
    %v117 = vadd.f32 %v115, %v116
    %v118 = vrot.slane %v117, 4
    %v119 = vadd.f32 %v117, %v118
    %v120 = vrot.slane %v119, 2
    %v121 = vadd.f32 %v119, %v120
    %v122 = vrot.slane %v121, 1
    %v123 = vadd.f32 %v121, %v122
    %v124 = vsel %vm95, %v84, 0.0
    %v125 = vsel %vm97, %v85, 0.0
    %v126 = vadd.f32 %v124, %v125
    %v127 = vrot.slane %v126, 4
    %v128 = vadd.f32 %v126, %v127
    %v129 = vrot.slane %v128, 2
    %v130 = vadd.f32 %v128, %v129
    %v131 = vrot.slane %v130, 1
    %v132 = vadd.f32 %v130, %v131
    %v133 = vsel %vm95, %v86, 0.0
    %v134 = vsel %vm97, %v87, 0.0
    %v135 = vadd.f32 %v133, %v134
    %v136 = vrot.slane %v135, 4
    %v137 = vadd.f32 %v135, %v136
    %v138 = vrot.slane %v137, 2
    %v139 = vadd.f32 %v137, %v138
    %v140 = vrot.slane %v139, 1
    %v141 = vadd.f32 %v139, %v140
    %v142 = vsel %vm95, %v88, 0.0
    %v143 = vsel %vm97, %v89, 0.0
    %v144 = vadd.f32 %v142, %v143
    %v145 = vrot.slane %v144, 4
    %v146 = vadd.f32 %v144, %v145
    %v147 = vrot.slane %v146, 2
    %v148 = vadd.f32 %v146, %v147
    %v149 = vrot.slane %v148, 1
    %v150 = vadd.f32 %v148, %v149
    %v151 = vsel %vm95, %v90, 0.0
    %v152 = vsel %vm97, %v91, 0.0
    %v153 = vadd.f32 %v151, %v152
    %v154 = vrot.slane %v153, 4
    %v155 = vadd.f32 %v153, %v154
    %v156 = vrot.slane %v155, 2
    %v157 = vadd.f32 %v155, %v156
    %v158 = vrot.slane %v157, 1
    %v159 = vadd.f32 %v157, %v158
    %v160 = vsel %vm95, %v92, 0.0
    %v161 = vsel %vm97, %v93, 0.0
    %v162 = vadd.f32 %v160, %v161
    %v163 = vrot.slane %v162, 4
    %v164 = vadd.f32 %v162, %v163
    %v165 = vrot.slane %v164, 2
    %v166 = vadd.f32 %v164, %v165
    %v167 = vrot.slane %v166, 1
    %v168 = vadd.f32 %v166, %v167
    %vm177 = vcmask 1041409
    %v178 = vsel %vm177, %v114, %v105
    %vm179 = vcmask 1042434
    %v180 = vsel %vm179, %v123, %v178
    %vm181 = vcmask 1043459
    %v182 = vsel %vm181, %v132, %v180
    %vm183 = vcmask 1044484
    %v184 = vsel %vm183, %v141, %v182
    %vm185 = vcmask 1045509
    %v186 = vsel %vm185, %v150, %v184
    %vm187 = vcmask 1046534
    %v188 = vsel %vm187, %v159, %v186
    %vm189 = vcmask 1047559
    %v190 = vsel %vm189, %v168, %v188
    %v192 = vadd.f32 %v94, %v190
    %193 = vst.msk [vmem:[#allocation2] sm:$0xff] %vm95, %v192
    // Predicated region
    $region26: #{tpu_custom_call.1} parent=1 // pred_check
      %p194 = pneg %p34
    $region27: #{tpu_custom_call.1} parent=1 // pred_check_branch
      %196 = sbr.rel (%p194) target = $region29
    $region28: #{tpu_custom_call.1} parent=1 // pred_region
      %v197 = vld [vmem:[#allocation2] sm:$0xff]
      %v198 = vmul.f32 %v197, 0.083333336
      %v199 = vld [vmem:[#allocation6] sm:$0xff]
      %v200 = vld [vmem:[#allocation3 + $0x40] sm:$0xff]
      %v201 = vld [vmem:[#allocation3 + $0x48] sm:$0xff]
      %v202 = vld [vmem:[#allocation3 + $0x50] sm:$0xff]
      %v203 = vld [vmem:[#allocation3 + $0x58] sm:$0xff]
      %v205 = vsel %vm95, %v198, 0
      %207 = vmatpush.msra.mxu0 0.0
      %208 = vmatpush.msra.mxu0 0.0
      %209 = vmatpush.msra.mxu0 0.0
      %210 = vmatpush.msra.mxu0 0.0
      %211 = vmatpush.msra.mxu0 0.0
      %212 = vmatpush.msra.mxu0 0.0
      %213 = vmatpush.msra.mxu0 0.0
      %214 = vmatpush.msra.mxu0 0.0
      %215 = vmatpush.msra.mxu0 0.0
      %216 = vmatpush.msra.mxu0 0.0
      %217 = vmatpush.msra.mxu0 0.0
      %218 = vmatpush.msra.mxu0 0.0
      %219 = vmatpush.msra.mxu0 %v203
      %220 = vmatpush.msra.mxu0 %v202
      %221 = vmatpush.msra.mxu0 %v201
      %222 = vmatpush.msra.mxu0 %v200
      %223 = vmatmul.f32.gmra.mxu0 %v205
      %v224 = vpop.f32.mrf.mxu0
      %v225 = vadd.f32 0.0, %v224
      %226 = vdwg.mxu0
      %v227 = vadd.f32 %v199, %v225
      %228 = vst [vmem:[#allocation6] sm:$0xff] %v227
    $region29: #{tpu_custom_call.1} parent=1 // pred_fallthru
      _
    // Predicated region
    $region30: #{tpu_custom_call.1} parent=1 // pred_check
      _
    $region31: #{tpu_custom_call.1} parent=1 // pred_check_branch
      %230 = sbr.rel (0) target = $region33
    $region32: #{tpu_custom_call.1} parent=1 // pred_region
      %232 = vsyncadd [#allocation5], 96
      %s233 = sshll.u32 [#allocation6], 4
      %s234 = int_to_ptr.vmem [resolvable:$true] %s233
      %s235 = sshll.u32 %s4, 4
      %s236 = int_to_ptr.hbm [resolvable:$true] %s235
      %241 = dma.vmem_to_hbm [thread:$0]  %s234, 32, %s236, [#allocation5], 32, 32, 2
    $region33: #{tpu_custom_call.1} parent=1 // pred_fallthru
      _
    // Predicated region
    $region34: #{tpu_custom_call.1} parent=1 // pred_check
      _
    $region35: #{tpu_custom_call.1} parent=1 // pred_check_branch
      %243 = sbr.rel (0) target = $region37
    $region36: #{tpu_custom_call.1} parent=1 // pred_region
      %245 = dma.done [#allocation5], 128
    $region37: #{tpu_custom_call.1} parent=1 // pred_fallthru
      _
    %246 = vsyncpa [#allocation4], 1
    %247 = vsyncpa [#allocation5], 1

</llo_original>
